<compile_context>
chip_gen: v5e
topology: v5e:2x2
jax: 0.10.0
libtpu: 0.0.40
codegen_flags: <defaults>
</compile_context>

<pallas_src>
import functools
import math

import jax
import jax.numpy as jnp
import numpy as np
from jax.experimental import pallas as pl
from jax.experimental.pallas import tpu as pltpu

_SQRT_2_OVER_PI = 0.7978845608028654


def _gelu_tanh(x):
    return 0.5 * x * (1.0 + jnp.tanh(_SQRT_2_OVER_PI * (x + 0.044715 * x * x * x)))


def mlp_kernel(x_ref, w1_ref, b1_ref, w2_ref, b2_ref, o_ref):
    # bf16 operands into the MXU, f32 accumulation.
    x = x_ref[...].astype(jnp.bfloat16)                               # (TM, C)
    h = jnp.dot(x, w1_ref[...], preferred_element_type=jnp.float32)   # (TM, H)
    h = _gelu_tanh(h + b1_ref[...])                                   # f32 VPU/EUP
    h = h.astype(jnp.bfloat16)
    y = jnp.dot(h, w2_ref[...], preferred_element_type=jnp.float32)   # (TM, Co)
    o_ref[...] = (y + b2_ref[...]).astype(o_ref.dtype)


def _round_up(x, m):
    return (x + m - 1) // m * m


@functools.partial(jax.jit, static_argnames=("tm",))
def mlp_forward(x, params, *, tm=1024):
    """x: (..., C).  params = (w1 (C,H), b1 (H,), w2 (H,Co), b2 (Co,))."""
    w1, b1, w2, b2 = params
    orig_shape = x.shape
    C = orig_shape[-1]
    H = w1.shape[1]
    C_out = w2.shape[1]
    M = math.prod(orig_shape[:-1])

    x2 = x.reshape(M, C)            # keep native dtype: no extra HBM copy
    out_dtype = x.dtype

    # Row tile: as large as requested, but keep >= MIN_GRID grid steps so each
    # of v7x's 2 TensorCores still gets >= 2 pipelined steps.
    MIN_GRID = 4
    tm_cap = _round_up(pl.cdiv(M, MIN_GRID), 8)
    tm_eff = max(8, min(_round_up(tm, 8), tm_cap))
    grid = pl.cdiv(M, tm_eff)       # ragged last tile handled by Pallas masking

    # Pre-cast weights to bf16 (halves their DMA + VMEM); biases stay f32.
    w1b = w1.astype(jnp.bfloat16)
    w2b = w2.astype(jnp.bfloat16)
    b1f = b1.reshape(1, H).astype(jnp.float32)
    b2f = b2.reshape(1, C_out).astype(jnp.float32)

    # VMEM budget: double-buffered x/out tiles + resident bf16 weights + the
    # (TM, H) intermediate, plus slack.  Clamped to stay within v7x's 64 MiB
    # physical VMEM while raising v5e's 16 MiB scoped default.
    est = (2 * tm_eff * C * x2.dtype.itemsize
           + 2 * tm_eff * C_out * out_dtype.itemsize
           + tm_eff * H * 4
           + 2 * (C * H + H * C_out) * 2
           + 4 * (H + C_out) * 4
           + (2 << 20))
    vmem_limit = int(min(max(est, 32 << 20), 48 << 20))

    out = pl.pallas_call(
        mlp_kernel,
        out_shape=jax.ShapeDtypeStruct((M, C_out), out_dtype),
        grid_spec=pltpu.PrefetchScalarGridSpec(
            num_scalar_prefetch=0,
            grid=(grid,),
            in_specs=[
                pl.BlockSpec((tm_eff, C), lambda i: (i, 0)),
                # Weights / biases: constant index maps -> stay VMEM-resident
                # across the whole grid (fetched once).
                # TODO(synk): for very large H on v7x/v5e, pipeline_mode=
                # pl.Buffered(1) on these four specs single-buffers the
                # grid-invariant weights for extra VMEM headroom.
                pl.BlockSpec((C, H), lambda i: (0, 0)),
                pl.BlockSpec((1, H), lambda i: (0, 0)),
                pl.BlockSpec((H, C_out), lambda i: (0, 0)),
                pl.BlockSpec((1, C_out), lambda i: (0, 0)),
            ],
            out_specs=pl.BlockSpec((tm_eff, C_out), lambda i: (i, 0)),
        ),
        compiler_params=pltpu.CompilerParams(
            dimension_semantics=("parallel",),
            vmem_limit_bytes=vmem_limit),
    )(x2, w1b, b1f, w2b, b2f)

    return out.reshape(*orig_shape[:-1], C_out)


def make_params(key, in_features, hidden_features, out_features):
    """PyTorch-style Linear init; weights stored as (in, out)."""
    k1, k2, k3, k4 = jax.random.split(key, 4)
    bound1 = 1.0 / np.sqrt(in_features)
    bound2 = 1.0 / np.sqrt(hidden_features)
    w1 = jax.random.uniform(k1, (in_features, hidden_features), jnp.float32,
                            -bound1, bound1)
    b1 = jax.random.uniform(k2, (hidden_features,), jnp.float32, -bound1, bound1)
    w2 = jax.random.uniform(k3, (hidden_features, out_features), jnp.float32,
                            -bound2, bound2)
    b2 = jax.random.uniform(k4, (out_features,), jnp.float32, -bound2, bound2)
    return (w1, b1, w2, b2)


def ref_forward(x, params):
    """Pure-JAX f32 reference mirroring the PyTorch forward (drop=0.0)."""
    w1, b1, w2, b2 = params
    h = _gelu_tanh(x @ w1 + b1)
    return h @ w2 + b2


if __name__ == "__main__":
    key = jax.random.PRNGKey(0)
    kx, kp = jax.random.split(key)

    # Small ViT-style shapes: batch=2, seq=256, embed=128, hidden=256.
    B, S, C, H = 2, 256, 128, 256
    params = make_params(kp, C, H, C)

    # Case 1: row count divisible by the tile.
    x = jax.random.normal(kx, (B, S, C), jnp.float32)
    out = jax.block_until_ready(mlp_forward(x, params))
    ref = jax.block_until_ready(ref_forward(x, params))
    np.testing.assert_allclose(np.asarray(out), np.asarray(ref),
                               rtol=2e-2, atol=2e-2)

    # Case 2: ragged row count (exercises the no-pad, masked-last-tile path).
    x2 = jax.random.normal(jax.random.PRNGKey(1), (B, 250, C), jnp.float32)
    out2 = jax.block_until_ready(mlp_forward(x2, params))
    ref2 = jax.block_until_ready(ref_forward(x2, params))
    np.testing.assert_allclose(np.asarray(out2), np.asarray(ref2),
                               rtol=2e-2, atol=2e-2)

    print("KERNEL_OK")
</pallas_src>

<mosaic_0001>
module attributes {stable_mosaic.version = 11 : i64} {
  func.func @mlp_kernel(%arg0: i32, %arg1: memref<128x128xf32, #tpu.memory_space<vmem>>, %arg2: memref<128x256xbf16, #tpu.memory_space<vmem>>, %arg3: memref<1x256xf32, #tpu.memory_space<vmem>>, %arg4: memref<256x128xbf16, #tpu.memory_space<vmem>>, %arg5: memref<1x128xf32, #tpu.memory_space<vmem>>, %arg6: memref<128x128xf32, #tpu.memory_space<vmem>>) attributes {dimension_semantics = [#tpu.dimension_semantics<parallel>], iteration_bounds = array<i64: 4>, scalar_prefetch = 0 : i64, scratch_operands = 0 : i64, tpu.core_type = #tpu.core_type<tc>, window_params = [{transform_indices = @transform_0, window_bounds = array<i64: 128, 128>}, {pipeline_mode = #tpu.pipeline_mode<synchronous>, transform_indices = @transform_1, window_bounds = array<i64: 128, 256>}, {pipeline_mode = #tpu.pipeline_mode<synchronous>, transform_indices = @transform_2, window_bounds = array<i64: 1, 256>}, {pipeline_mode = #tpu.pipeline_mode<synchronous>, transform_indices = @transform_3, window_bounds = array<i64: 256, 128>}, {pipeline_mode = #tpu.pipeline_mode<synchronous>, transform_indices = @transform_4, window_bounds = array<i64: 1, 128>}, {transform_indices = @transform_5, window_bounds = array<i64: 128, 128>}]} {
    %c0 = arith.constant 0 : index
    %c0_0 = arith.constant 0 : index
    %0 = vector.load %arg1[%c0, %c0_0] : memref<128x128xf32, #tpu.memory_space<vmem>>, vector<128x128xf32>
    %1 = arith.truncf %0 : vector<128x128xf32> to vector<128x128xbf16>
    %c0_1 = arith.constant 0 : index
    %c0_2 = arith.constant 0 : index
    %2 = vector.load %arg2[%c0_1, %c0_2] : memref<128x256xbf16, #tpu.memory_space<vmem>>, vector<128x256xbf16>
    %cst = arith.constant dense<0.000000e+00> : vector<128x256xf32>
    %3 = tpu.matmul %1, %2, %cst {dimension_numbers = #tpu.dot_dimension_numbers<[1], [0], [0], [1], [0, 0, 1, 1], [], []>} : vector<128x128xbf16>, vector<128x256xbf16>, vector<128x256xf32> -> vector<128x256xf32>
    %c0_3 = arith.constant 0 : index
    %c0_4 = arith.constant 0 : index
    %4 = vector.load %arg3[%c0_3, %c0_4] : memref<1x256xf32, #tpu.memory_space<vmem>>, vector<1x256xf32>
    %5 = vector.broadcast %4 : vector<1x256xf32> to vector<128x256xf32>
    %6 = arith.addf %3, %5 : vector<128x256xf32>
    %cst_5 = arith.constant 5.000000e-01 : f32
    %7 = vector.broadcast %cst_5 : f32 to vector<128x256xf32>
    %8 = arith.mulf %7, %6 : vector<128x256xf32>
    %cst_6 = arith.constant 4.471500e-02 : f32
    %9 = vector.broadcast %cst_6 : f32 to vector<128x256xf32>
    %10 = arith.mulf %9, %6 : vector<128x256xf32>
    %11 = arith.mulf %10, %6 : vector<128x256xf32>
    %12 = arith.mulf %11, %6 : vector<128x256xf32>
    %13 = arith.addf %6, %12 : vector<128x256xf32>
    %cst_7 = arith.constant 0.797884583 : f32
    %14 = vector.broadcast %cst_7 : f32 to vector<128x256xf32>
    %15 = arith.mulf %14, %13 : vector<128x256xf32>
    %16 = math.tanh %15 : vector<128x256xf32>
    %cst_8 = arith.constant 1.000000e+00 : f32
    %17 = vector.broadcast %cst_8 : f32 to vector<128x256xf32>
    %18 = arith.addf %17, %16 : vector<128x256xf32>
    %19 = arith.mulf %8, %18 : vector<128x256xf32>
    %20 = arith.truncf %19 : vector<128x256xf32> to vector<128x256xbf16>
    %c0_9 = arith.constant 0 : index
    %c0_10 = arith.constant 0 : index
    %21 = vector.load %arg4[%c0_9, %c0_10] : memref<256x128xbf16, #tpu.memory_space<vmem>>, vector<256x128xbf16>
    %cst_11 = arith.constant dense<0.000000e+00> : vector<128x128xf32>
    %22 = tpu.matmul %20, %21, %cst_11 {dimension_numbers = #tpu.dot_dimension_numbers<[1], [0], [0], [1], [0, 0, 1, 1], [], []>} : vector<128x256xbf16>, vector<256x128xbf16>, vector<128x128xf32> -> vector<128x128xf32>
    %c0_12 = arith.constant 0 : index
    %c0_13 = arith.constant 0 : index
    %23 = vector.load %arg5[%c0_12, %c0_13] : memref<1x128xf32, #tpu.memory_space<vmem>>, vector<1x128xf32>
    %24 = vector.broadcast %23 : vector<1x128xf32> to vector<128x128xf32>
    %25 = arith.addf %22, %24 : vector<128x128xf32>
    %c0_14 = arith.constant 0 : index
    %c0_15 = arith.constant 0 : index
    %26 = vector.load %arg6[%c0_14, %c0_15] : memref<128x128xf32, #tpu.memory_space<vmem>>, vector<128x128xf32>
    tpu.vector_store %arg6[%c0_14, %c0_15], %25 {strides = array<i32>} : memref<128x128xf32, #tpu.memory_space<vmem>>, vector<128x128xf32>,
    return
  }
  func.func @transform_0(%arg0: i32) -> (i32, i32) {
    %c0_i32 = arith.constant 0 : i32
    %c0_i32_0 = arith.constant 0 : i32
    return %arg0, %c0_i32 : i32, i32
  }
  func.func @transform_1(%arg0: i32) -> (i32, i32) {
    %c0_i32 = arith.constant 0 : i32
    %c0_i32_0 = arith.constant 0 : i32
    %c0_i32_1 = arith.constant 0 : i32
    return %c0_i32, %c0_i32_0 : i32, i32
  }
  func.func @transform_2(%arg0: i32) -> (i32, i32) {
    %c0_i32 = arith.constant 0 : i32
    %c0_i32_0 = arith.constant 0 : i32
    %c0_i32_1 = arith.constant 0 : i32
    return %c0_i32, %c0_i32_0 : i32, i32
  }
  func.func @transform_3(%arg0: i32) -> (i32, i32) {
    %c0_i32 = arith.constant 0 : i32
    %c0_i32_0 = arith.constant 0 : i32
    %c0_i32_1 = arith.constant 0 : i32
    return %c0_i32, %c0_i32_0 : i32, i32
  }
  func.func @transform_4(%arg0: i32) -> (i32, i32) {
    %c0_i32 = arith.constant 0 : i32
    %c0_i32_0 = arith.constant 0 : i32
    %c0_i32_1 = arith.constant 0 : i32
    return %c0_i32, %c0_i32_0 : i32, i32
  }
  func.func @transform_5(%arg0: i32) -> (i32, i32) {
    %c0_i32 = arith.constant 0 : i32
    %c0_i32_0 = arith.constant 0 : i32
    return %arg0, %c0_i32 : i32, i32
  }
}

</mosaic_0001>

<llo_original>
// kernel: mlp_forward.1
$region0: #{mlp_forward.1}
  #allocation0 [shape = 'u32[]', space=smem, size = 0x4, offset = 0x4, fixed_abs, tag = 'smem constant byte address 0x4 - core index']
  #allocation1 [shape = 'u32[72,128]{1,0:T(1,128)}', space=vmem, size = 0x9000, scoped, tag = 'internal scratch']
  %s0 = inlined_call_operand.vmem [shape: f32[512,128], index: 0, kind: input, shape index: {}]
  %s1 = inlined_call_operand.vmem [shape: bf16[128,256], index: 1, kind: input, shape index: {}]
  %s2 = inlined_call_operand.vmem [shape: f32[1,256], index: 2, kind: input, shape index: {}]
  %s3 = inlined_call_operand.vmem [shape: bf16[256,128], index: 3, kind: input, shape index: {}]
  %s4 = inlined_call_operand.vmem [shape: f32[1,128], index: 4, kind: input, shape index: {}]
  %s5 = inlined_call_operand.hbm [shape: f32[512,128], index: 5, kind: output, shape index: {}]
  %s6 = sld [smem:[#allocation0]]
  $region53: #{mlp_forward.1} parent=0
    _
  %s8 = ssub.s32 1, %s6
  %s9 = scalar_select 0, %s8, %s6
  $region1: #{mlp_forward.1} parent=0
    #allocation2 [shape = 'u8[131072]{0}', space=vmem, size = 0x20000, scoped, tag = 'output window, operand 0']
    #allocation3 [shape = 's32[2]{0}', space=sflag, size = 0x8, scoped, tag = 'scoped memory for mlp_forward.1']
    %10 = vsyncpa [#allocation3], 0
    %s11 = scalar_lea.sflag [#allocation3], 1
    %12 = vsyncpa %s11, 0
    loop: start=0, step=1, limit=6
    $region2: #{mlp_forward.1} parent=1 // loop_pre_header
      _
    $region3: #{mlp_forward.1} parent=1 // loop_header
      %s14 = sphi 0, %s18
      %p15 = scmp.ge.s32.totalorder %s14, 6
      %s24 = sphi 0, %s26
      %s27 = sphi 0, %s24
      %s28 = sphi 0, %s27
      %s44 = sphi 0, %s28
      %s48 = sphi 0, %s48
      %s50 = sphi 0, %s48
      %s51 = sphi 0, %s50
      %s65 = sphi 0, %s51
      %s69 = sphi 0, %s69
      %s71 = sphi 0, %s69
      %s72 = sphi 0, %s71
      %s86 = sphi 0, %s72
      %s90 = sphi 0, %s90
      %s92 = sphi 0, %s90
      %s93 = sphi 0, %s92
      %s107 = sphi 0, %s93
      %s111 = sphi 0, %s111
      %s113 = sphi 0, %s111
      %s114 = sphi 0, %s113
      %s128 = sphi 0, %s114
      %s134 = sphi 0, %s136
      %s137 = sphi 0, %s134
      %s138 = sphi 0, %s137
      %s154 = sphi 0, %s138
    $region4: #{mlp_forward.1} parent=1 // loop_header_branch
      %17 = sbr.rel (%p15) target = $region8
    $region5: #{mlp_forward.1} parent=1 // loop_body
      %s19 = ssub.s32 %s14, 1
      %s20 = ssub.s32 %s14, 2
      %s21 = sadd.s32 %s14, 1
      %s22 = ssub.s32 %s14, %s21
      %p23 = scmp.eq.s32.totalorder %s22, 0
      %s25 = sadd.s32 %s24, 1
      %s26 = scalar_select %p23, %s24, %s25
      %p29 = pneg %p23
      %p30 = scmp.eq.s32.totalorder %s14, 3
      %p31 = por %p29, %p30
      %p32 = scmp.ne.s32.totalorder %s24, %s27
      %p33 = scmp.eq.s32.totalorder %s14, 0
      %p34 = por %p32, %p33
      %p35 = scmp.ne.s32.totalorder %s24, %s27
      %p36 = scmp.eq.s32.totalorder %s19, 3
      %p37 = por %p35, %p36
      %p38 = scmp.ne.s32.totalorder %s27, %s28
      %p39 = scmp.eq.s32.totalorder %s19, 0
      %p40 = por %p38, %p39
      %p41 = scmp.ne.s32.totalorder %s27, %s28
      %p42 = scmp.eq.s32.totalorder %s20, 3
      %p43 = por %p41, %p42
      %p45 = scmp.ne.s32.totalorder %s28, %s44
      %p46 = scmp.eq.s32.totalorder %s20, 0
      %p47 = por %p45, %p46
      %s49 = sadd.s32 %s48, 1
      %p52 = scmp.eq.s32.totalorder %s14, 3
      %p53 = scmp.ne.s32.totalorder %s48, %s50
      %p54 = scmp.eq.s32.totalorder %s14, 0
      %p55 = por %p53, %p54
      %p56 = scmp.ne.s32.totalorder %s48, %s50
      %p57 = scmp.eq.s32.totalorder %s19, 3
      %p58 = por %p56, %p57
      %p59 = scmp.ne.s32.totalorder %s50, %s51
      %p60 = scmp.eq.s32.totalorder %s19, 0
      %p61 = por %p59, %p60
      %p62 = scmp.ne.s32.totalorder %s50, %s51
      %p63 = scmp.eq.s32.totalorder %s20, 3
      %p64 = por %p62, %p63
      %p66 = scmp.ne.s32.totalorder %s51, %s65
      %p67 = scmp.eq.s32.totalorder %s20, 0
      %p68 = por %p66, %p67
      %s70 = sadd.s32 %s69, 1
      %p73 = scmp.eq.s32.totalorder %s14, 3
      %p74 = scmp.ne.s32.totalorder %s69, %s71
      %p75 = scmp.eq.s32.totalorder %s14, 0
      %p76 = por %p74, %p75
      %p77 = scmp.ne.s32.totalorder %s69, %s71
      %p78 = scmp.eq.s32.totalorder %s19, 3
      %p79 = por %p77, %p78
      %p80 = scmp.ne.s32.totalorder %s71, %s72
      %p81 = scmp.eq.s32.totalorder %s19, 0
      %p82 = por %p80, %p81
      %p83 = scmp.ne.s32.totalorder %s71, %s72
      %p84 = scmp.eq.s32.totalorder %s20, 3
      %p85 = por %p83, %p84
      %p87 = scmp.ne.s32.totalorder %s72, %s86
      %p88 = scmp.eq.s32.totalorder %s20, 0
      %p89 = por %p87, %p88
      %s91 = sadd.s32 %s90, 1
      %p94 = scmp.eq.s32.totalorder %s14, 3
      %p95 = scmp.ne.s32.totalorder %s90, %s92
      %p96 = scmp.eq.s32.totalorder %s14, 0
      %p97 = por %p95, %p96
      %p98 = scmp.ne.s32.totalorder %s90, %s92
      %p99 = scmp.eq.s32.totalorder %s19, 3
      %p100 = por %p98, %p99
      %p101 = scmp.ne.s32.totalorder %s92, %s93
      %p102 = scmp.eq.s32.totalorder %s19, 0
      %p103 = por %p101, %p102
      %p104 = scmp.ne.s32.totalorder %s92, %s93
      %p105 = scmp.eq.s32.totalorder %s20, 3
      %p106 = por %p104, %p105
      %p108 = scmp.ne.s32.totalorder %s93, %s107
      %p109 = scmp.eq.s32.totalorder %s20, 0
      %p110 = por %p108, %p109
      %s112 = sadd.s32 %s111, 1
      %p115 = scmp.eq.s32.totalorder %s14, 3
      %p116 = scmp.ne.s32.totalorder %s111, %s113
      %p117 = scmp.eq.s32.totalorder %s14, 0
      %p118 = por %p116, %p117
      %p119 = scmp.ne.s32.totalorder %s111, %s113
      %p120 = scmp.eq.s32.totalorder %s19, 3
      %p121 = por %p119, %p120
      %p122 = scmp.ne.s32.totalorder %s113, %s114
      %p123 = scmp.eq.s32.totalorder %s19, 0
      %p124 = por %p122, %p123
      %p125 = scmp.ne.s32.totalorder %s113, %s114
      %p126 = scmp.eq.s32.totalorder %s20, 3
      %p127 = por %p125, %p126
      %p129 = scmp.ne.s32.totalorder %s114, %s128
      %p130 = scmp.eq.s32.totalorder %s20, 0
      %p131 = por %p129, %p130
      %s132 = ssub.s32 %s14, %s21
      %p133 = scmp.eq.s32.totalorder %s132, 0
      %s135 = sadd.s32 %s134, 1
      %s136 = scalar_select %p133, %s134, %s135
      %p139 = pneg %p133
      %p140 = scmp.eq.s32.totalorder %s14, 3
      %p141 = por %p139, %p140
      %p142 = scmp.ne.s32.totalorder %s134, %s137
      %p143 = scmp.eq.s32.totalorder %s14, 0
      %p144 = por %p142, %p143
      %p145 = scmp.ne.s32.totalorder %s134, %s137
      %p146 = scmp.eq.s32.totalorder %s19, 3
      %p147 = por %p145, %p146
      %p148 = scmp.ne.s32.totalorder %s137, %s138
      %p149 = scmp.eq.s32.totalorder %s19, 0
      %p150 = por %p148, %p149
      %p151 = scmp.ne.s32.totalorder %s137, %s138
      %p152 = scmp.eq.s32.totalorder %s20, 3
      %p153 = por %p151, %p152
      %p155 = scmp.ne.s32.totalorder %s138, %s154
      %p156 = scmp.eq.s32.totalorder %s20, 0
      %p157 = por %p155, %p156
      %p158 = scmp.le.s32.totalorder 1, %s14
      %p159 = scmp.lt.s32.totalorder %s14, 5
      %p160 = pnand %p158, %p159
      %p161 = pneg %p160
      // Predicated region
      $region9: #{mlp_forward.1} parent=5 // pred_check
        _
      $region10: #{mlp_forward.1} parent=5 // pred_check_branch
        %163 = sbr.rel (%p160) target = $region12
      $region11: #{mlp_forward.1} parent=5 // pred_region
        %s164 = ssub.s32 %s14, 1
        // Predicated region
        $region13: #{mlp_forward.1} parent=11 // pred_check
          %p165 = pneg %p61
        $region14: #{mlp_forward.1} parent=11 // pred_check_branch
          %167 = sbr.rel (%p165) target = $region16
        $region15: #{mlp_forward.1} parent=11 // pred_region
          _
        $region16: #{mlp_forward.1} parent=11 // pred_fallthru
          _
        // Predicated region
        $region17: #{mlp_forward.1} parent=11 // pred_check
          %p168 = pneg %p82
        $region18: #{mlp_forward.1} parent=11 // pred_check_branch
          %170 = sbr.rel (%p168) target = $region20
        $region19: #{mlp_forward.1} parent=11 // pred_region
          _
        $region20: #{mlp_forward.1} parent=11 // pred_fallthru
          _
        // Predicated region
        $region21: #{mlp_forward.1} parent=11 // pred_check
          %p171 = pneg %p103
        $region22: #{mlp_forward.1} parent=11 // pred_check_branch
          %173 = sbr.rel (%p171) target = $region24
        $region23: #{mlp_forward.1} parent=11 // pred_region
          _
        $region24: #{mlp_forward.1} parent=11 // pred_fallthru
          _
        // Predicated region
        $region25: #{mlp_forward.1} parent=11 // pred_check
          %p174 = pneg %p124
        $region26: #{mlp_forward.1} parent=11 // pred_check_branch
          %176 = sbr.rel (%p174) target = $region28
        $region27: #{mlp_forward.1} parent=11 // pred_region
          _
        $region28: #{mlp_forward.1} parent=11 // pred_fallthru
          _
      $region12: #{mlp_forward.1} parent=5 // pred_fallthru
        _
      %p177 = scmp.lt.s32.totalorder %s14, 4
      // Predicated region
      $region29: #{mlp_forward.1} parent=5 // pred_check
        %p178 = pneg %p177
      $region30: #{mlp_forward.1} parent=5 // pred_check_branch
        %180 = sbr.rel (%p178) target = $region32
      $region31: #{mlp_forward.1} parent=5 // pred_region
        // Predicated region
        $region33: #{mlp_forward.1} parent=31 // pred_check
          %p181 = pneg %p34
        $region34: #{mlp_forward.1} parent=31 // pred_check_branch
          %183 = sbr.rel (%p181) target = $region36
        $region35: #{mlp_forward.1} parent=31 // pred_region
          %s184 = smul.u32 16, %s14
          %p185 = scmp.lt.s32.totalorder %s184, 63
          %s186 = scalar_select %p185, %s184, 63
          %s187 = smul.addr %s186, 8
          %s188 = scalar_lea.vmem %s0, %s187
          %s189 = smul.u32 16, %s14
        $region36: #{mlp_forward.1} parent=31 // pred_fallthru
          _
      $region32: #{mlp_forward.1} parent=5 // pred_fallthru
        _
      %p190 = scmp.le.s32.totalorder 1, %s14
      %p191 = scmp.lt.s32.totalorder %s14, 5
      %p192 = pnand %p190, %p191
      %p193 = pneg %p192
      // Predicated region
      $region37: #{mlp_forward.1} parent=5 // pred_check
        _
      $region38: #{mlp_forward.1} parent=5 // pred_check_branch
        %195 = sbr.rel (%p192) target = $region40
      $region39: #{mlp_forward.1} parent=5 // pred_region
        %s196 = ssub.s32 %s14, 1
        %s197 = smul.u32 16, %s19
        %p198 = scmp.lt.s32.totalorder %s197, 63
        %s199 = scalar_select %p198, %s197, 63
        %s200 = smul.addr %s199, 8
        %s201 = scalar_lea.vmem %s0, %s200
        %p202 = pneg %p40
        %p203 = pneg %p37
        %p204 = pneg %p61
        %p205 = pneg %p58
        %p206 = pneg %p82
        %p207 = pneg %p79
        %p208 = pneg %p103
        %p209 = pneg %p100
        %p210 = pneg %p124
        %p211 = pneg %p121
        %p212 = pneg %p150
        %p213 = pneg %p147
        %s214 = sand.u32 %s137, 1
        %s215 = scalar_lea.sflag [#allocation3], %s214
        %s216 = sand.u32 %s137, 1
        %s217 = smul.addr %s216, 128
        %s218 = scalar_lea.vmem [#allocation2], %s217
        %s219 = smul.u32 16, %s19
        %p220 = scmp.lt.s32.totalorder %s219, 63
        %s221 = scalar_select %p220, %s219, 63
        %s222 = smul.addr %s221, 8
        %s223 = scalar_lea.vmem %s0, %s222
        %s224 = smul.u32 16, %s19
        %s225 = smul.u32 16, %s19
        %v226 = vld [vmem:[%s223] sm:$0xff]
        %v227 = vld [vmem:[%s223 + $0x8] sm:$0xff]
        %v228 = vld [vmem:[%s223 + $0x10] sm:$0xff]
        %v229 = vld [vmem:[%s223 + $0x18] sm:$0xff]
        %v230 = vld [vmem:[%s223 + $0x20] sm:$0xff]
        %v231 = vld [vmem:[%s223 + $0x28] sm:$0xff]
        %v232 = vld [vmem:[%s223 + $0x30] sm:$0xff]
        %v233 = vld [vmem:[%s223 + $0x38] sm:$0xff]
        %v234 = vld [vmem:[%s223 + $0x40] sm:$0xff]
        %v235 = vld [vmem:[%s223 + $0x48] sm:$0xff]
        %v236 = vld [vmem:[%s223 + $0x50] sm:$0xff]
        %v237 = vld [vmem:[%s223 + $0x58] sm:$0xff]
        %v238 = vld [vmem:[%s223 + $0x60] sm:$0xff]
        %v239 = vld [vmem:[%s223 + $0x68] sm:$0xff]
        %v240 = vld [vmem:[%s223 + $0x70] sm:$0xff]
        %v241 = vld [vmem:[%s223 + $0x78] sm:$0xff]
        %v242 = vpack.c.bf16 %v227, %v226
        %v243 = vpack.c.bf16 %v229, %v228
        %v244 = vpack.c.bf16 %v231, %v230
        %v245 = vpack.c.bf16 %v233, %v232
        %v246 = vpack.c.bf16 %v235, %v234
        %v247 = vpack.c.bf16 %v237, %v236
        %v248 = vpack.c.bf16 %v239, %v238
        %v249 = vpack.c.bf16 %v241, %v240
        %v250 = vld [vmem:[%s1] sm:$0xff]
        %v251 = vld [vmem:[%s1 + $0x8] sm:$0xff]
        %v252 = vld [vmem:[%s1 + $0x10] sm:$0xff]
        %v253 = vld [vmem:[%s1 + $0x18] sm:$0xff]
        %v254 = vld [vmem:[%s1 + $0x20] sm:$0xff]
        %v255 = vld [vmem:[%s1 + $0x28] sm:$0xff]
        %v256 = vld [vmem:[%s1 + $0x30] sm:$0xff]
        %v257 = vld [vmem:[%s1 + $0x38] sm:$0xff]
        %v258 = vld [vmem:[%s1 + $0x40] sm:$0xff]
        %v259 = vld [vmem:[%s1 + $0x48] sm:$0xff]
        %v260 = vld [vmem:[%s1 + $0x50] sm:$0xff]
        %v261 = vld [vmem:[%s1 + $0x58] sm:$0xff]
        %v262 = vld [vmem:[%s1 + $0x60] sm:$0xff]
        %v263 = vld [vmem:[%s1 + $0x68] sm:$0xff]
        %v264 = vld [vmem:[%s1 + $0x70] sm:$0xff]
        %v265 = vld [vmem:[%s1 + $0x78] sm:$0xff]
        %v266 = vld [vmem:[%s2] sm:$0x3]
        %v268 = vperm.slane %v266, 0
        %v269 = vperm.slane %v266, 1
        %v288 = vunpack.c.l.b16 %v250
        %v289 = vunpack.c.h.b16 %v250
        %v290 = vunpack.c.l.b16 %v251
        %v291 = vunpack.c.h.b16 %v251
        %v292 = vunpack.c.l.b16 %v252
        %v293 = vunpack.c.h.b16 %v252
        %v294 = vunpack.c.l.b16 %v253
        %v295 = vunpack.c.h.b16 %v253
        %v296 = vunpack.c.l.b16 %v254
        %v297 = vunpack.c.h.b16 %v254
        %v298 = vunpack.c.l.b16 %v255
        %v299 = vunpack.c.h.b16 %v255
        %v300 = vunpack.c.l.b16 %v256
        %v301 = vunpack.c.h.b16 %v256
        %v302 = vunpack.c.l.b16 %v257
        %v303 = vunpack.c.h.b16 %v257
        %v304 = vunpack.c.l.b16 %v258
        %v305 = vunpack.c.h.b16 %v258
        %v306 = vunpack.c.l.b16 %v259
        %v307 = vunpack.c.h.b16 %v259
        %v308 = vunpack.c.l.b16 %v260
        %v309 = vunpack.c.h.b16 %v260
        %v310 = vunpack.c.l.b16 %v261
        %v311 = vunpack.c.h.b16 %v261
        %v312 = vunpack.c.l.b16 %v262
        %v313 = vunpack.c.h.b16 %v262
        %v314 = vunpack.c.l.b16 %v263
        %v315 = vunpack.c.h.b16 %v263
        %v316 = vunpack.c.l.b16 %v264
        %v317 = vunpack.c.h.b16 %v264
        %v318 = vunpack.c.l.b16 %v265
        %v319 = vunpack.c.h.b16 %v265
        %v320 = vpack.c.b16 %v290, %v288
        %v321 = vpack.c.b16 %v291, %v289
        %v322 = vpack.c.b16 %v294, %v292
        %v323 = vpack.c.b16 %v295, %v293
        %v324 = vpack.c.b16 %v298, %v296
        %v325 = vpack.c.b16 %v299, %v297
        %v326 = vpack.c.b16 %v302, %v300
        %v327 = vpack.c.b16 %v303, %v301
        %v328 = vpack.c.b16 %v306, %v304
        %v329 = vpack.c.b16 %v307, %v305
        %v330 = vpack.c.b16 %v310, %v308
        %v331 = vpack.c.b16 %v311, %v309
        %v332 = vpack.c.b16 %v314, %v312
        %v333 = vpack.c.b16 %v315, %v313
        %v334 = vpack.c.b16 %v318, %v316
        %v335 = vpack.c.b16 %v319, %v317
        %352 = vmatpush.bf16.msra.mxu0 %v334
        %353 = vmatpush.bf16.msra.mxu0 %v332
        %354 = vmatpush.bf16.msra.mxu0 %v330
        %355 = vmatpush.bf16.msra.mxu0 %v328
        %356 = vmatpush.bf16.msra.mxu0 %v326
        %357 = vmatpush.bf16.msra.mxu0 %v324
        %358 = vmatpush.bf16.msra.mxu0 %v322
        %359 = vmatpush.bf16.msra.mxu0 %v320
        %360 = vmatmul.bf16.gmra.mxu0 %v242
        %v361 = vpop.f32.mrf.mxu0
        %v362 = vadd.f32 %v268, %v361
        %v363 = vpop.f32.mrf.mxu0
        %v364 = vadd.f32 %v268, %v363
        %365 = vmatmul.bf16.gmra.mxu0 %v243
        %v366 = vpop.f32.mrf.mxu0
        %v367 = vadd.f32 %v268, %v366
        %v368 = vpop.f32.mrf.mxu0
        %v369 = vadd.f32 %v268, %v368
        %370 = vmatmul.bf16.gmra.mxu0 %v244
        %v371 = vpop.f32.mrf.mxu0
        %v372 = vadd.f32 %v268, %v371
        %v373 = vpop.f32.mrf.mxu0
        %v374 = vadd.f32 %v268, %v373
        %375 = vmatmul.bf16.gmra.mxu0 %v245
        %v376 = vpop.f32.mrf.mxu0
        %v377 = vadd.f32 %v268, %v376
        %v378 = vpop.f32.mrf.mxu0
        %v379 = vadd.f32 %v268, %v378
        %380 = vmatmul.bf16.gmra.mxu0 %v246
        %v381 = vpop.f32.mrf.mxu0
        %v382 = vadd.f32 %v268, %v381
        %v383 = vpop.f32.mrf.mxu0
        %v384 = vadd.f32 %v268, %v383
        %385 = vmatmul.bf16.gmra.mxu0 %v247
        %v386 = vpop.f32.mrf.mxu0
        %v387 = vadd.f32 %v268, %v386
        %v388 = vpop.f32.mrf.mxu0
        %v389 = vadd.f32 %v268, %v388
        %390 = vmatmul.bf16.gmra.mxu0 %v248
        %v391 = vpop.f32.mrf.mxu0
        %v392 = vadd.f32 %v268, %v391
        %v393 = vpop.f32.mrf.mxu0
        %v394 = vadd.f32 %v268, %v393
        %395 = vmatmul.bf16.gmra.mxu0 %v249
        %v396 = vpop.f32.mrf.mxu0
        %v397 = vadd.f32 %v268, %v396
        %v398 = vpop.f32.mrf.mxu0
        %v399 = vadd.f32 %v268, %v398
        %400 = vdwg.mxu0
        %401 = vmatpush.bf16.msra.mxu0 %v335
        %402 = vmatpush.bf16.msra.mxu0 %v333
        %403 = vmatpush.bf16.msra.mxu0 %v331
        %404 = vmatpush.bf16.msra.mxu0 %v329
        %405 = vmatpush.bf16.msra.mxu0 %v327
        %406 = vmatpush.bf16.msra.mxu0 %v325
        %407 = vmatpush.bf16.msra.mxu0 %v323
        %408 = vmatpush.bf16.msra.mxu0 %v321
        %409 = vmatmul.bf16.gmra.mxu0 %v242
        %v410 = vpop.f32.mrf.mxu0
        %v411 = vadd.f32 %v269, %v410
        %v412 = vpop.f32.mrf.mxu0
        %v413 = vadd.f32 %v269, %v412
        %414 = vmatmul.bf16.gmra.mxu0 %v243
        %v415 = vpop.f32.mrf.mxu0
        %v416 = vadd.f32 %v269, %v415
        %v417 = vpop.f32.mrf.mxu0
        %v418 = vadd.f32 %v269, %v417
        %419 = vmatmul.bf16.gmra.mxu0 %v244
        %v420 = vpop.f32.mrf.mxu0
        %v421 = vadd.f32 %v269, %v420
        %v422 = vpop.f32.mrf.mxu0
        %v423 = vadd.f32 %v269, %v422
        %424 = vmatmul.bf16.gmra.mxu0 %v245
        %v425 = vpop.f32.mrf.mxu0
        %v426 = vadd.f32 %v269, %v425
        %v427 = vpop.f32.mrf.mxu0
        %v428 = vadd.f32 %v269, %v427
        %429 = vmatmul.bf16.gmra.mxu0 %v246
        %v430 = vpop.f32.mrf.mxu0
        %v431 = vadd.f32 %v269, %v430
        %v432 = vpop.f32.mrf.mxu0
        %v433 = vadd.f32 %v269, %v432
        %434 = vmatmul.bf16.gmra.mxu0 %v247
        %v435 = vpop.f32.mrf.mxu0
        %v436 = vadd.f32 %v269, %v435
        %v437 = vpop.f32.mrf.mxu0
        %v438 = vadd.f32 %v269, %v437
        %439 = vmatmul.bf16.gmra.mxu0 %v248
        %v440 = vpop.f32.mrf.mxu0
        %v441 = vadd.f32 %v269, %v440
        %v442 = vpop.f32.mrf.mxu0
        %v443 = vadd.f32 %v269, %v442
        %444 = vmatmul.bf16.gmra.mxu0 %v249
        %v445 = vpop.f32.mrf.mxu0
        %v446 = vadd.f32 %v269, %v445
        %v447 = vpop.f32.mrf.mxu0
        %v448 = vadd.f32 %v269, %v447
        %449 = vdwg.mxu0
        %v450 = vmul.f32 %v362, 0.5
        %v451 = vmul.f32 %v411, 0.5
        %v452 = vmul.f32 %v364, 0.5
        %v453 = vmul.f32 %v413, 0.5
        %v454 = vmul.f32 %v367, 0.5
        %v455 = vmul.f32 %v416, 0.5
        %v456 = vmul.f32 %v369, 0.5
        %v457 = vmul.f32 %v418, 0.5
        %v458 = vmul.f32 %v372, 0.5
        %v459 = vmul.f32 %v421, 0.5
        %v460 = vmul.f32 %v374, 0.5
        %v461 = vmul.f32 %v423, 0.5
        %v462 = vmul.f32 %v377, 0.5
        %v463 = vmul.f32 %v426, 0.5
        %v464 = vmul.f32 %v379, 0.5
        %v465 = vmul.f32 %v428, 0.5
        %v466 = vmul.f32 %v382, 0.5
        %v467 = vmul.f32 %v431, 0.5
        %v468 = vmul.f32 %v384, 0.5
        %v469 = vmul.f32 %v433, 0.5
        %v470 = vmul.f32 %v387, 0.5
        %v471 = vmul.f32 %v436, 0.5
        %v472 = vmul.f32 %v389, 0.5
        %v473 = vmul.f32 %v438, 0.5
        %v474 = vmul.f32 %v392, 0.5
        %v475 = vmul.f32 %v441, 0.5
        %v476 = vmul.f32 %v394, 0.5
        %v477 = vmul.f32 %v443, 0.5
        %v478 = vmul.f32 %v397, 0.5
        %v479 = vmul.f32 %v446, 0.5
        %v480 = vmul.f32 %v399, 0.5
        %v481 = vmul.f32 %v448, 0.5
        %v482 = vmul.f32 %v362, 0.044715
        %v483 = vmul.f32 %v411, 0.044715
        %v484 = vmul.f32 %v364, 0.044715
        %v485 = vmul.f32 %v413, 0.044715
        %v486 = vmul.f32 %v367, 0.044715
        %v487 = vmul.f32 %v416, 0.044715
        %v488 = vmul.f32 %v369, 0.044715
        %v489 = vmul.f32 %v418, 0.044715
        %v490 = vmul.f32 %v372, 0.044715
        %v491 = vmul.f32 %v421, 0.044715
        %v492 = vmul.f32 %v374, 0.044715
        %v493 = vmul.f32 %v423, 0.044715
        %v494 = vmul.f32 %v377, 0.044715
        %v495 = vmul.f32 %v426, 0.044715
        %v496 = vmul.f32 %v379, 0.044715
        %v497 = vmul.f32 %v428, 0.044715
        %v498 = vmul.f32 %v382, 0.044715
        %v499 = vmul.f32 %v431, 0.044715
        %v500 = vmul.f32 %v384, 0.044715
        %v501 = vmul.f32 %v433, 0.044715
        %v502 = vmul.f32 %v387, 0.044715
        %v503 = vmul.f32 %v436, 0.044715
        %v504 = vmul.f32 %v389, 0.044715
        %v505 = vmul.f32 %v438, 0.044715
        %v506 = vmul.f32 %v392, 0.044715
        %v507 = vmul.f32 %v441, 0.044715
        %v508 = vmul.f32 %v394, 0.044715
        %v509 = vmul.f32 %v443, 0.044715
        %v510 = vmul.f32 %v397, 0.044715
        %v511 = vmul.f32 %v446, 0.044715
        %v512 = vmul.f32 %v399, 0.044715
        %v513 = vmul.f32 %v448, 0.044715
        %v514 = vmul.f32 %v482, %v362
        %v515 = vmul.f32 %v483, %v411
        %v516 = vmul.f32 %v484, %v364
        %v517 = vmul.f32 %v485, %v413
        %v518 = vmul.f32 %v486, %v367
        %v519 = vmul.f32 %v487, %v416
        %v520 = vmul.f32 %v488, %v369
        %v521 = vmul.f32 %v489, %v418
        %v522 = vmul.f32 %v490, %v372
        %v523 = vmul.f32 %v491, %v421
        %v524 = vmul.f32 %v492, %v374
        %v525 = vmul.f32 %v493, %v423
        %v526 = vmul.f32 %v494, %v377
        %v527 = vmul.f32 %v495, %v426
        %v528 = vmul.f32 %v496, %v379
        %v529 = vmul.f32 %v497, %v428
        %v530 = vmul.f32 %v498, %v382
        %v531 = vmul.f32 %v499, %v431
        %v532 = vmul.f32 %v500, %v384
        %v533 = vmul.f32 %v501, %v433
        %v534 = vmul.f32 %v502, %v387
        %v535 = vmul.f32 %v503, %v436
        %v536 = vmul.f32 %v504, %v389
        %v537 = vmul.f32 %v505, %v438
        %v538 = vmul.f32 %v506, %v392
        %v539 = vmul.f32 %v507, %v441
        %v540 = vmul.f32 %v508, %v394
        %v541 = vmul.f32 %v509, %v443
        %v542 = vmul.f32 %v510, %v397
        %v543 = vmul.f32 %v511, %v446
        %v544 = vmul.f32 %v512, %v399
        %v545 = vmul.f32 %v513, %v448
        %v546 = vmul.f32 %v514, %v362
        %v547 = vmul.f32 %v515, %v411
        %v548 = vmul.f32 %v516, %v364
        %v549 = vmul.f32 %v517, %v413
        %v550 = vmul.f32 %v518, %v367
        %v551 = vmul.f32 %v519, %v416
        %v552 = vmul.f32 %v520, %v369
        %v553 = vmul.f32 %v521, %v418
        %v554 = vmul.f32 %v522, %v372
        %v555 = vmul.f32 %v523, %v421
        %v556 = vmul.f32 %v524, %v374
        %v557 = vmul.f32 %v525, %v423
        %v558 = vmul.f32 %v526, %v377
        %v559 = vmul.f32 %v527, %v426
        %v560 = vmul.f32 %v528, %v379
        %v561 = vmul.f32 %v529, %v428
        %v562 = vmul.f32 %v530, %v382
        %v563 = vmul.f32 %v531, %v431
        %v564 = vmul.f32 %v532, %v384
        %v565 = vmul.f32 %v533, %v433
        %v566 = vmul.f32 %v534, %v387
        %v567 = vmul.f32 %v535, %v436
        %v568 = vmul.f32 %v536, %v389
        %v569 = vmul.f32 %v537, %v438
        %v570 = vmul.f32 %v538, %v392
        %v571 = vmul.f32 %v539, %v441
        %v572 = vmul.f32 %v540, %v394
        %v573 = vmul.f32 %v541, %v443
        %v574 = vmul.f32 %v542, %v397
        %v575 = vmul.f32 %v543, %v446
        %v576 = vmul.f32 %v544, %v399
        %v577 = vmul.f32 %v545, %v448
        %v578 = vadd.f32 %v362, %v546
        %v579 = vadd.f32 %v411, %v547
        %v580 = vadd.f32 %v364, %v548
        %v581 = vadd.f32 %v413, %v549
        %v582 = vadd.f32 %v367, %v550
        %v583 = vadd.f32 %v416, %v551
        %v584 = vadd.f32 %v369, %v552
        %v585 = vadd.f32 %v418, %v553
        %v586 = vadd.f32 %v372, %v554
        %v587 = vadd.f32 %v421, %v555
        %v588 = vadd.f32 %v374, %v556
        %v589 = vadd.f32 %v423, %v557
        %v590 = vadd.f32 %v377, %v558
        %v591 = vadd.f32 %v426, %v559
        %v592 = vadd.f32 %v379, %v560
        %v593 = vadd.f32 %v428, %v561
        %v594 = vadd.f32 %v382, %v562
        %v595 = vadd.f32 %v431, %v563
        %v596 = vadd.f32 %v384, %v564
        %v597 = vadd.f32 %v433, %v565
        %v598 = vadd.f32 %v387, %v566
        %v599 = vadd.f32 %v436, %v567
        %v600 = vadd.f32 %v389, %v568
        %v601 = vadd.f32 %v438, %v569
        %v602 = vadd.f32 %v392, %v570
        %v603 = vadd.f32 %v441, %v571
        %v604 = vadd.f32 %v394, %v572
        %v605 = vadd.f32 %v443, %v573
        %v606 = vadd.f32 %v397, %v574
        %v607 = vadd.f32 %v446, %v575
        %v608 = vadd.f32 %v399, %v576
        %v609 = vadd.f32 %v448, %v577
        %v610 = vmul.f32 %v578, 0.7978846
        %v611 = vmul.f32 %v579, 0.7978846
        %v612 = vmul.f32 %v580, 0.7978846
        %v613 = vmul.f32 %v581, 0.7978846
        %v614 = vmul.f32 %v582, 0.7978846
        %v615 = vmul.f32 %v583, 0.7978846
        %v616 = vmul.f32 %v584, 0.7978846
        %v617 = vmul.f32 %v585, 0.7978846
        %v618 = vmul.f32 %v586, 0.7978846
        %v619 = vmul.f32 %v587, 0.7978846
        %v620 = vmul.f32 %v588, 0.7978846
        %v621 = vmul.f32 %v589, 0.7978846
        %v622 = vmul.f32 %v590, 0.7978846
        %v623 = vmul.f32 %v591, 0.7978846
        %v624 = vmul.f32 %v592, 0.7978846
        %v625 = vmul.f32 %v593, 0.7978846
        %v626 = vmul.f32 %v594, 0.7978846
        %v627 = vmul.f32 %v595, 0.7978846
        %v628 = vmul.f32 %v596, 0.7978846
        %v629 = vmul.f32 %v597, 0.7978846
        %v630 = vmul.f32 %v598, 0.7978846
        %v631 = vmul.f32 %v599, 0.7978846
        %v632 = vmul.f32 %v600, 0.7978846
        %v633 = vmul.f32 %v601, 0.7978846
        %v634 = vmul.f32 %v602, 0.7978846
        %v635 = vmul.f32 %v603, 0.7978846
        %v636 = vmul.f32 %v604, 0.7978846
        %v637 = vmul.f32 %v605, 0.7978846
        %v638 = vmul.f32 %v606, 0.7978846
        %v639 = vmul.f32 %v607, 0.7978846
        %v640 = vmul.f32 %v608, 0.7978846
        %v641 = vmul.f32 %v609, 0.7978846
        %v642 = vtanh.pop %v610
        %v643 = vtanh.pop %v611
        %v644 = vtanh.pop %v612
        %v645 = vtanh.pop %v613
        %v646 = vtanh.pop %v614
        %v647 = vtanh.pop %v615
        %v648 = vtanh.pop %v616
        %v649 = vtanh.pop %v617
        %v650 = vtanh.pop %v618
        %v651 = vtanh.pop %v619
        %v652 = vtanh.pop %v620
        %v653 = vtanh.pop %v621
        %v654 = vtanh.pop %v622
        %v655 = vtanh.pop %v623
        %v656 = vtanh.pop %v624
        %v657 = vtanh.pop %v625
        %v658 = vtanh.pop %v626
        %v659 = vtanh.pop %v627
        %v660 = vtanh.pop %v628
        %v661 = vtanh.pop %v629
        %v662 = vtanh.pop %v630
        %v663 = vtanh.pop %v631
        %v664 = vtanh.pop %v632
        %v665 = vtanh.pop %v633
        %v666 = vtanh.pop %v634
        %v667 = vtanh.pop %v635
        %v668 = vtanh.pop %v636
        %v669 = vtanh.pop %v637
        %v670 = vtanh.pop %v638
        %v671 = vtanh.pop %v639
        %v672 = vtanh.pop %v640
        %v673 = vtanh.pop %v641
        %v674 = vadd.f32 %v642, 1.0
        %v675 = vadd.f32 %v643, 1.0
        %v676 = vadd.f32 %v644, 1.0
        %v677 = vadd.f32 %v645, 1.0
        %v678 = vadd.f32 %v646, 1.0
        %v679 = vadd.f32 %v647, 1.0
        %v680 = vadd.f32 %v648, 1.0
        %v681 = vadd.f32 %v649, 1.0
        %v682 = vadd.f32 %v650, 1.0
        %v683 = vadd.f32 %v651, 1.0
        %v684 = vadd.f32 %v652, 1.0
        %v685 = vadd.f32 %v653, 1.0
        %v686 = vadd.f32 %v654, 1.0
        %v687 = vadd.f32 %v655, 1.0
        %v688 = vadd.f32 %v656, 1.0
        %v689 = vadd.f32 %v657, 1.0
        %v690 = vadd.f32 %v658, 1.0
        %v691 = vadd.f32 %v659, 1.0
        %v692 = vadd.f32 %v660, 1.0
        %v693 = vadd.f32 %v661, 1.0
        %v694 = vadd.f32 %v662, 1.0
        %v695 = vadd.f32 %v663, 1.0
        %v696 = vadd.f32 %v664, 1.0
        %v697 = vadd.f32 %v665, 1.0
        %v698 = vadd.f32 %v666, 1.0
        %v699 = vadd.f32 %v667, 1.0
        %v700 = vadd.f32 %v668, 1.0
        %v701 = vadd.f32 %v669, 1.0
        %v702 = vadd.f32 %v670, 1.0
        %v703 = vadd.f32 %v671, 1.0
        %v704 = vadd.f32 %v672, 1.0
        %v705 = vadd.f32 %v673, 1.0
        %v706 = vmul.f32 %v450, %v674
        %v707 = vmul.f32 %v451, %v675
        %v708 = vmul.f32 %v452, %v676
        %v709 = vmul.f32 %v453, %v677
        %v710 = vmul.f32 %v454, %v678
        %v711 = vmul.f32 %v455, %v679
        %v712 = vmul.f32 %v456, %v680
        %v713 = vmul.f32 %v457, %v681
        %v714 = vmul.f32 %v458, %v682
        %v715 = vmul.f32 %v459, %v683
        %v716 = vmul.f32 %v460, %v684
        %v717 = vmul.f32 %v461, %v685
        %v718 = vmul.f32 %v462, %v686
        %v719 = vmul.f32 %v463, %v687
        %v720 = vmul.f32 %v464, %v688
        %v721 = vmul.f32 %v465, %v689
        %v722 = vmul.f32 %v466, %v690
        %v723 = vmul.f32 %v467, %v691
        %v724 = vmul.f32 %v468, %v692
        %v725 = vmul.f32 %v469, %v693
        %v726 = vmul.f32 %v470, %v694
        %v727 = vmul.f32 %v471, %v695
        %v728 = vmul.f32 %v472, %v696
        %v729 = vmul.f32 %v473, %v697
        %v730 = vmul.f32 %v474, %v698
        %v731 = vmul.f32 %v475, %v699
        %v732 = vmul.f32 %v476, %v700
        %v733 = vmul.f32 %v477, %v701
        %v734 = vmul.f32 %v478, %v702
        %v735 = vmul.f32 %v479, %v703
        %v736 = vmul.f32 %v480, %v704
        %v737 = vmul.f32 %v481, %v705
        %v738 = vpack.c.bf16 %v708, %v706
        %v739 = vpack.c.bf16 %v709, %v707
        %v740 = vpack.c.bf16 %v712, %v710
        %v741 = vpack.c.bf16 %v713, %v711
        %v742 = vpack.c.bf16 %v716, %v714
        %v743 = vpack.c.bf16 %v717, %v715
        %v744 = vpack.c.bf16 %v720, %v718
        %v745 = vpack.c.bf16 %v721, %v719
        %v746 = vpack.c.bf16 %v724, %v722
        %v747 = vpack.c.bf16 %v725, %v723
        %v748 = vpack.c.bf16 %v728, %v726
        %v749 = vpack.c.bf16 %v729, %v727
        %v750 = vpack.c.bf16 %v732, %v730
        %v751 = vpack.c.bf16 %v733, %v731
        %v752 = vpack.c.bf16 %v736, %v734
        %v753 = vpack.c.bf16 %v737, %v735
        %v754 = vld [vmem:[%s3] sm:$0xf]
        %v755 = vld [vmem:[%s3 + $0x4] sm:$0xf]
        %v756 = vld [vmem:[%s3 + $0x8] sm:$0xf]
        %v757 = vld [vmem:[%s3 + $0xc] sm:$0xf]
        %v758 = vld [vmem:[%s3 + $0x10] sm:$0xf]
        %v759 = vld [vmem:[%s3 + $0x14] sm:$0xf]
        %v760 = vld [vmem:[%s3 + $0x18] sm:$0xf]
        %v761 = vld [vmem:[%s3 + $0x1c] sm:$0xf]
        %v762 = vld [vmem:[%s3 + $0x20] sm:$0xf]
        %v763 = vld [vmem:[%s3 + $0x24] sm:$0xf]
        %v764 = vld [vmem:[%s3 + $0x28] sm:$0xf]
        %v765 = vld [vmem:[%s3 + $0x2c] sm:$0xf]
        %v766 = vld [vmem:[%s3 + $0x30] sm:$0xf]
        %v767 = vld [vmem:[%s3 + $0x34] sm:$0xf]
        %v768 = vld [vmem:[%s3 + $0x38] sm:$0xf]
        %v769 = vld [vmem:[%s3 + $0x3c] sm:$0xf]
        %v770 = vld [vmem:[%s3 + $0x40] sm:$0xf]
        %v771 = vld [vmem:[%s3 + $0x44] sm:$0xf]
        %v772 = vld [vmem:[%s3 + $0x48] sm:$0xf]
        %v773 = vld [vmem:[%s3 + $0x4c] sm:$0xf]
        %v774 = vld [vmem:[%s3 + $0x50] sm:$0xf]
        %v775 = vld [vmem:[%s3 + $0x54] sm:$0xf]
        %v776 = vld [vmem:[%s3 + $0x58] sm:$0xf]
        %v777 = vld [vmem:[%s3 + $0x5c] sm:$0xf]
        %v778 = vld [vmem:[%s3 + $0x60] sm:$0xf]
        %v779 = vld [vmem:[%s3 + $0x64] sm:$0xf]
        %v780 = vld [vmem:[%s3 + $0x68] sm:$0xf]
        %v781 = vld [vmem:[%s3 + $0x6c] sm:$0xf]
        %v782 = vld [vmem:[%s3 + $0x70] sm:$0xf]
        %v783 = vld [vmem:[%s3 + $0x74] sm:$0xf]
        %v784 = vld [vmem:[%s3 + $0x78] sm:$0xf]
        %v785 = vld [vmem:[%s3 + $0x7c] sm:$0xf]
        %v786 = vld [vmem:[%s4] sm:$0x1]
        %v788 = vperm.slane %v786, 0
        %v822 = vunpack.c.l.b16 %v754
        %v823 = vunpack.c.l.b16 %v755
        %v824 = vunpack.c.l.b16 %v756
        %v825 = vunpack.c.l.b16 %v757
        %v826 = vunpack.c.l.b16 %v758
        %v827 = vunpack.c.l.b16 %v759
        %v828 = vunpack.c.l.b16 %v760
        %v829 = vunpack.c.l.b16 %v761
        %v830 = vunpack.c.l.b16 %v762
        %v831 = vunpack.c.l.b16 %v763
        %v832 = vunpack.c.l.b16 %v764
        %v833 = vunpack.c.l.b16 %v765
        %v834 = vunpack.c.l.b16 %v766
        %v835 = vunpack.c.l.b16 %v767
        %v836 = vunpack.c.l.b16 %v768
        %v837 = vunpack.c.l.b16 %v769
        %v838 = vunpack.c.l.b16 %v770
        %v839 = vunpack.c.l.b16 %v771
        %v840 = vunpack.c.l.b16 %v772
        %v841 = vunpack.c.l.b16 %v773
        %v842 = vunpack.c.l.b16 %v774
        %v843 = vunpack.c.l.b16 %v775
        %v844 = vunpack.c.l.b16 %v776
        %v845 = vunpack.c.l.b16 %v777
        %v846 = vunpack.c.l.b16 %v778
        %v847 = vunpack.c.l.b16 %v779
        %v848 = vunpack.c.l.b16 %v780
        %v849 = vunpack.c.l.b16 %v781
        %v850 = vunpack.c.l.b16 %v782
        %v851 = vunpack.c.l.b16 %v783
        %v852 = vunpack.c.l.b16 %v784
        %v853 = vunpack.c.l.b16 %v785
        %v854 = vpack.c.b16 %v823, %v822
        %v855 = vpack.c.b16 %v825, %v824
        %v856 = vpack.c.b16 %v827, %v826
        %v857 = vpack.c.b16 %v829, %v828
        %v858 = vpack.c.b16 %v831, %v830
        %v859 = vpack.c.b16 %v833, %v832
        %v860 = vpack.c.b16 %v835, %v834
        %v861 = vpack.c.b16 %v837, %v836
        %v862 = vpack.c.b16 %v839, %v838
        %v863 = vpack.c.b16 %v841, %v840
        %v864 = vpack.c.b16 %v843, %v842
        %v865 = vpack.c.b16 %v845, %v844
        %v866 = vpack.c.b16 %v847, %v846
        %v867 = vpack.c.b16 %v849, %v848
        %v868 = vpack.c.b16 %v851, %v850
        %v869 = vpack.c.b16 %v853, %v852
        %886 = vmatpush.bf16.msra.mxu0 %v861
        %887 = vmatpush.bf16.msra.mxu0 %v860
        %888 = vmatpush.bf16.msra.mxu0 %v859
        %889 = vmatpush.bf16.msra.mxu0 %v858
        %890 = vmatpush.bf16.msra.mxu0 %v857
        %891 = vmatpush.bf16.msra.mxu0 %v856
        %892 = vmatpush.bf16.msra.mxu0 %v855
        %893 = vmatpush.bf16.msra.mxu0 %v854
        %894 = vmatmul.bf16.gmra.mxu0 %v738
        %v895 = vpop.f32.mrf.mxu0
        %v896 = vadd.f32 %v788, %v895
        %v897 = vpop.f32.mrf.mxu0
        %v898 = vadd.f32 %v788, %v897
        %899 = vmatmul.bf16.gmra.mxu0 %v740
        %v900 = vpop.f32.mrf.mxu0
        %v901 = vadd.f32 %v788, %v900
        %v902 = vpop.f32.mrf.mxu0
        %v903 = vadd.f32 %v788, %v902
        %904 = vmatmul.bf16.gmra.mxu0 %v742
        %v905 = vpop.f32.mrf.mxu0
        %v906 = vadd.f32 %v788, %v905
        %v907 = vpop.f32.mrf.mxu0
        %v908 = vadd.f32 %v788, %v907
        %909 = vmatmul.bf16.gmra.mxu0 %v744
        %v910 = vpop.f32.mrf.mxu0
        %v911 = vadd.f32 %v788, %v910
        %v912 = vpop.f32.mrf.mxu0
        %v913 = vadd.f32 %v788, %v912
        %914 = vmatmul.bf16.gmra.mxu0 %v746
        %v915 = vpop.f32.mrf.mxu0
        %v916 = vadd.f32 %v788, %v915
        %v917 = vpop.f32.mrf.mxu0
        %v918 = vadd.f32 %v788, %v917
        %919 = vmatmul.bf16.gmra.mxu0 %v748
        %v920 = vpop.f32.mrf.mxu0
        %v921 = vadd.f32 %v788, %v920
        %v922 = vpop.f32.mrf.mxu0
        %v923 = vadd.f32 %v788, %v922
        %924 = vmatmul.bf16.gmra.mxu0 %v750
        %v925 = vpop.f32.mrf.mxu0
        %v926 = vadd.f32 %v788, %v925
        %v927 = vpop.f32.mrf.mxu0
        %v928 = vadd.f32 %v788, %v927
        %929 = vmatmul.bf16.gmra.mxu0 %v752
        %v930 = vpop.f32.mrf.mxu0
        %v931 = vadd.f32 %v788, %v930
        %v932 = vpop.f32.mrf.mxu0
        %v933 = vadd.f32 %v788, %v932
        %934 = vdwg.mxu0
        %935 = vmatpush.bf16.msra.mxu0 %v869
        %936 = vmatpush.bf16.msra.mxu0 %v868
        %937 = vmatpush.bf16.msra.mxu0 %v867
        %938 = vmatpush.bf16.msra.mxu0 %v866
        %939 = vmatpush.bf16.msra.mxu0 %v865
        %940 = vmatpush.bf16.msra.mxu0 %v864
        %941 = vmatpush.bf16.msra.mxu0 %v863
        %942 = vmatpush.bf16.msra.mxu0 %v862
        %943 = vmatmul.bf16.gmra.mxu0 %v739
        %v944 = vpop.f32.mrf.mxu0
        %v945 = vadd.f32 %v896, %v944
        %v946 = vpop.f32.mrf.mxu0
        %v947 = vadd.f32 %v898, %v946
        %948 = vmatmul.bf16.gmra.mxu0 %v741
        %v949 = vpop.f32.mrf.mxu0
        %v950 = vadd.f32 %v901, %v949
        %v951 = vpop.f32.mrf.mxu0
        %v952 = vadd.f32 %v903, %v951
        %953 = vmatmul.bf16.gmra.mxu0 %v743
        %v954 = vpop.f32.mrf.mxu0
        %v955 = vadd.f32 %v906, %v954
        %v956 = vpop.f32.mrf.mxu0
        %v957 = vadd.f32 %v908, %v956
        %958 = vmatmul.bf16.gmra.mxu0 %v745
        %v959 = vpop.f32.mrf.mxu0
        %v960 = vadd.f32 %v911, %v959
        %v961 = vpop.f32.mrf.mxu0
        %v962 = vadd.f32 %v913, %v961
        %963 = vmatmul.bf16.gmra.mxu0 %v747
        %v964 = vpop.f32.mrf.mxu0
        %v965 = vadd.f32 %v916, %v964
        %v966 = vpop.f32.mrf.mxu0
        %v967 = vadd.f32 %v918, %v966
        %968 = vmatmul.bf16.gmra.mxu0 %v749
        %v969 = vpop.f32.mrf.mxu0
        %v970 = vadd.f32 %v921, %v969
        %v971 = vpop.f32.mrf.mxu0
        %v972 = vadd.f32 %v923, %v971
        %973 = vmatmul.bf16.gmra.mxu0 %v751
        %v974 = vpop.f32.mrf.mxu0
        %v975 = vadd.f32 %v926, %v974
        %v976 = vpop.f32.mrf.mxu0
        %v977 = vadd.f32 %v928, %v976
        %978 = vmatmul.bf16.gmra.mxu0 %v753
        %v979 = vpop.f32.mrf.mxu0
        %v980 = vadd.f32 %v931, %v979
        %v981 = vpop.f32.mrf.mxu0
        %v982 = vadd.f32 %v933, %v981
        %983 = vdwg.mxu0
        %984 = vst [vmem:[%s218] sm:$0xff] %v945
        %985 = vst [vmem:[%s218 + $0x8] sm:$0xff] %v947
        %986 = vst [vmem:[%s218 + $0x10] sm:$0xff] %v950
        %987 = vst [vmem:[%s218 + $0x18] sm:$0xff] %v952
        %988 = vst [vmem:[%s218 + $0x20] sm:$0xff] %v955
        %989 = vst [vmem:[%s218 + $0x28] sm:$0xff] %v957
        %990 = vst [vmem:[%s218 + $0x30] sm:$0xff] %v960
        %991 = vst [vmem:[%s218 + $0x38] sm:$0xff] %v962
        %992 = vst [vmem:[%s218 + $0x40] sm:$0xff] %v965
        %993 = vst [vmem:[%s218 + $0x48] sm:$0xff] %v967
        %994 = vst [vmem:[%s218 + $0x50] sm:$0xff] %v970
        %995 = vst [vmem:[%s218 + $0x58] sm:$0xff] %v972
        %996 = vst [vmem:[%s218 + $0x60] sm:$0xff] %v975
        %997 = vst [vmem:[%s218 + $0x68] sm:$0xff] %v977
        %998 = vst [vmem:[%s218 + $0x70] sm:$0xff] %v980
        %999 = vst [vmem:[%s218 + $0x78] sm:$0xff] %v982
        %s1000 = sand.u32 %s137, 1
        %s1001 = scalar_lea.sflag [#allocation3], %s1000
        %s1002 = sand.u32 %s137, 1
        %s1003 = smul.addr %s1002, 128
        %s1004 = scalar_lea.vmem [#allocation2], %s1003
        // Predicated region
        $region41: #{mlp_forward.1} parent=39 // pred_check
          %p1005 = pneg %p147
        $region42: #{mlp_forward.1} parent=39 // pred_check_branch
          %1007 = sbr.rel (%p1005) target = $region44
        $region43: #{mlp_forward.1} parent=39 // pred_region
          %s1008 = smul.u32 16, %s19
          %1010 = vsyncadd %s1001, 0
          %s1011 = smul.addr %s1008, 8
          %s1012 = scalar_lea.hbm %s5, %s1011
          %s1013 = sshll.u32 %s1004, 4
          %s1014 = int_to_ptr.vmem [resolvable:$true] %s1013
          %s1015 = sshll.u32 %s1012, 4
          %s1016 = int_to_ptr.hbm [resolvable:$true] %s1015
          %1021 = dma.vmem_to_hbm [thread:$0]  %s1014, 2048, %s1016, %s1001, 128, 128, 8
        $region44: #{mlp_forward.1} parent=39 // pred_fallthru
          _
      $region40: #{mlp_forward.1} parent=5 // pred_fallthru
        _
      %p1022 = scmp.le.s32.totalorder 2, %s14
      // Predicated region
      $region45: #{mlp_forward.1} parent=5 // pred_check
        %p1023 = pneg %p1022
      $region46: #{mlp_forward.1} parent=5 // pred_check_branch
        %1025 = sbr.rel (%p1023) target = $region48
      $region47: #{mlp_forward.1} parent=5 // pred_region
        %s1026 = ssub.s32 %s14, 2
        // Predicated region
        $region49: #{mlp_forward.1} parent=47 // pred_check
          %p1027 = pneg %p153
        $region50: #{mlp_forward.1} parent=47 // pred_check_branch
          %1029 = sbr.rel (%p1027) target = $region52
        $region51: #{mlp_forward.1} parent=47 // pred_region
          %s1030 = sand.u32 %s138, 1
          %s1031 = scalar_lea.sflag [#allocation3], %s1030
          %s1032 = sand.u32 %s138, 1
          %s1033 = smul.addr %s1032, 128
          %s1034 = scalar_lea.vmem [#allocation2], %s1033
          %1036 = dma.done %s1031, 2048
        $region52: #{mlp_forward.1} parent=47 // pred_fallthru
          _
      $region48: #{mlp_forward.1} parent=5 // pred_fallthru
        _
    $region6: #{mlp_forward.1} parent=1 // loop_footer
      %s18 = sadd.s32 1, %s14
    $region7: #{mlp_forward.1} parent=1 // loop_footer_branch
      %13 = sbr.rel target = $region3
    $region8: #{mlp_forward.1} parent=1 // loop_exit
      _
    %1037 = vsyncpa [#allocation3], 1
    %s1038 = scalar_lea.sflag [#allocation3], 1
    %1039 = vsyncpa %s1038, 1

</llo_original>
